<compile_context>
chip_gen: v6e
topology: v6e:2x2x1
jax: 0.10.0
libtpu: 0.0.40
codegen_flags: <defaults>
</compile_context>

<pallas_src>
import functools

import jax
import jax.numpy as jnp
from jax import lax
from jax.experimental import pallas as pl
from jax.experimental.pallas import tpu as pltpu


def _capsem_kernel(x_ref, o_ref, *, inv_temperature, eps):
    # x_ref: (S, D, TR) tile -- S = group_size, D = capsule_dim (sublanes),
    #                           TR rows on the 128-wide lane axis.
    x = x_ref[...].astype(jnp.float32)

    # squared L2 norm along capsule_dim (sublane axis of each vreg)
    sq = jnp.sum(x * x, axis=1)                          # (S, TR)

    # softmax over group_size of (||x|| / temperature)
    logits = jnp.sqrt(sq) * inv_temperature              # (S, TR)
    m = jnp.max(logits, axis=0, keepdims=True)           # (1, TR)
    e = jnp.exp(logits - m)                              # (S, TR)
    sm = e / jnp.sum(e, axis=0, keepdims=True)           # (S, TR)

    # F.normalize(x, dim=-1, eps): x / max(||x||, eps) == x * rsqrt(max(sq, eps^2))
    inv_norm = lax.rsqrt(jnp.maximum(sq, eps * eps))     # (S, TR)

    # Fuse normalize + softmax weighting into one per-(S, TR) scale so the
    # only full-tile op is a single broadcast multiply.
    scale = (sm * inv_norm)[:, None, :]                  # (S, 1, TR)
    o_ref[...] = (x * scale).astype(o_ref.dtype)


def _round_up(n, m):
    return ((n + m - 1) // m) * m


def capsem_forward(x, *, num_capsules, capsule_dim, group_size,
                   eps=1e-6, temperature=1.0,
                   block_bytes=2 * 1024 * 1024):
    """CapSEM forward pass (matches the PyTorch module's semantics)."""
    assert num_capsules % group_size == 0
    S, D = int(group_size), int(capsule_dim)

    shp = x.shape
    total = 1
    for s in shp:
        total *= int(s)
    assert total % (S * D) == 0
    rows = total // (S * D)    # rows = batch_like * num_groups

    # (rows, S, D) -> (S, D, rows): rows become the dense lane axis.
    # (one extra HBM round-trip for the transpose; kernel itself is lane-dense)
    x3 = x.reshape(rows, S, D)
    xt = jnp.transpose(x3, (1, 2, 0))

    # Row tile from a VMEM budget per input block, multiple of 128 lanes.
    itemsize = jnp.dtype(x.dtype).itemsize
    bytes_per_row = S * D * itemsize
    tr = max(128, (block_bytes // bytes_per_row) // 128 * 128)
    rows128 = _round_up(rows, 128)
    tr = min(tr, rows128)
    # Prefer >= 2 grid steps when there is enough work (v7x: 2 TCs per chip).
    if tr >= rows128 and rows128 >= 256:
        tr = max(128, (rows128 // 2) // 128 * 128)
    grid = (rows + tr - 1) // tr
    rows_padded = grid * tr
    if rows_padded != rows:
        xt = jnp.pad(xt, ((0, 0), (0, 0), (0, rows_padded - rows)))

    kernel = functools.partial(_capsem_kernel,
                               inv_temperature=1.0 / float(temperature),
                               eps=float(eps))

    out_t = pl.pallas_call(
        kernel,
        out_shape=jax.ShapeDtypeStruct((S, D, rows_padded), x.dtype),
        grid_spec=pltpu.PrefetchScalarGridSpec(
            num_scalar_prefetch=0,
            grid=(grid,),
            in_specs=[pl.BlockSpec((S, D, tr), lambda i: (0, 0, i))],
            out_specs=pl.BlockSpec((S, D, tr), lambda i: (0, 0, i)),
        ),
        compiler_params=pltpu.CompilerParams(
            dimension_semantics=("parallel",),
            vmem_limit_bytes=32 * 1024 * 1024,
        ),
    )(xt)

    out3 = jnp.transpose(out_t[:, :, :rows], (2, 0, 1))   # (rows, S, D)
    return out3.reshape(shp)


def capsem_reference(x, *, num_capsules, capsule_dim, group_size,
                     eps=1e-6, temperature=1.0):
    """Pure-JAX reference mirroring the PyTorch forward."""
    shp = x.shape
    num_groups = num_capsules // group_size
    xr = x.reshape(-1, num_groups, group_size, capsule_dim).astype(jnp.float32)
    norms = jnp.sqrt(jnp.sum(xr * xr, axis=-1))
    sm = jax.nn.softmax(norms / temperature, axis=-1)
    normalized = xr / jnp.maximum(norms[..., None], eps)
    out = normalized * sm[..., None]
    return out.reshape(shp).astype(x.dtype)


if __name__ == "__main__":
    # Module configuration (consistent with CapSEM.__init__)
    num_capsules = 16
    capsule_dim = 8
    group_size = 4
    eps = 1e-6
    temperature = 1.0

    key = jax.random.PRNGKey(0)
    k1, k2 = jax.random.split(key)

    # Small case: (batch, num_capsules, capsule_dim)
    x_small = jax.random.normal(k1, (2, num_capsules, capsule_dim), jnp.float32)
    # Slightly larger case to exercise row padding and a multi-step grid.
    x_large = jax.random.normal(k2, (64, num_capsules, capsule_dim), jnp.float32)

    for x in (x_small, x_large):
        out = capsem_forward(x,
                             num_capsules=num_capsules,
                             capsule_dim=capsule_dim,
                             group_size=group_size,
                             eps=eps,
                             temperature=temperature)
        out = jax.block_until_ready(out)
        ref = capsem_reference(x,
                               num_capsules=num_capsules,
                               capsule_dim=capsule_dim,
                               group_size=group_size,
                               eps=eps,
                               temperature=temperature)
        assert out.shape == x.shape and out.dtype == x.dtype
        assert jnp.allclose(out, ref, atol=1e-5, rtol=1e-5)

    print("KERNEL_OK")
</pallas_src>

<mosaic_0001>
module attributes {stable_mosaic.version = 11 : i64} {
  func.func @_capsem_kernel(%arg0: i32, %arg1: memref<4x8x128xf32, #tpu.memory_space<vmem>>, %arg2: memref<4x8x128xf32, #tpu.memory_space<vmem>>) attributes {dimension_semantics = [#tpu.dimension_semantics<parallel>], iteration_bounds = array<i64: 1>, scalar_prefetch = 0 : i64, scratch_operands = 0 : i64, tpu.core_type = #tpu.core_type<tc>, window_params = [{transform_indices = @transform_0, window_bounds = array<i64: 4, 8, 128>}, {transform_indices = @transform_1, window_bounds = array<i64: 4, 8, 128>}]} {
    %c0 = arith.constant 0 : index
    %c0_0 = arith.constant 0 : index
    %c0_1 = arith.constant 0 : index
    %0 = vector.load %arg1[%c0, %c0_0, %c0_1] : memref<4x8x128xf32, #tpu.memory_space<vmem>>, vector<4x8x128xf32>
    %1 = arith.mulf %0, %0 : vector<4x8x128xf32>
    %cst = arith.constant dense<0.000000e+00> : vector<4x128xf32>
    %2 = vector.multi_reduction <add>, %1, %cst [1] : vector<4x8x128xf32> to vector<4x128xf32>
    %3 = math.sqrt %2 : vector<4x128xf32>
    %cst_2 = arith.constant 1.000000e+00 : f32
    %4 = vector.broadcast %cst_2 : f32 to vector<4x128xf32>
    %5 = arith.mulf %3, %4 : vector<4x128xf32>
    %cst_3 = arith.constant dense<0xFF800000> : vector<128xf32>
    %6 = vector.multi_reduction <maximumf>, %5, %cst_3 [0] : vector<4x128xf32> to vector<128xf32>
    %7 = vector.shape_cast %6 : vector<128xf32> to vector<1x128xf32>
    %8 = vector.broadcast %7 : vector<1x128xf32> to vector<4x128xf32>
    %9 = arith.subf %5, %8 : vector<4x128xf32>
    %10 = math.exp %9 : vector<4x128xf32>
    %cst_4 = arith.constant dense<0.000000e+00> : vector<128xf32>
    %11 = vector.multi_reduction <add>, %10, %cst_4 [0] : vector<4x128xf32> to vector<128xf32>
    %12 = vector.shape_cast %11 : vector<128xf32> to vector<1x128xf32>
    %13 = vector.broadcast %12 : vector<1x128xf32> to vector<4x128xf32>
    %14 = arith.divf %10, %13 : vector<4x128xf32>
    %cst_5 = arith.constant 9.99999996E-13 : f32
    %15 = vector.broadcast %cst_5 : f32 to vector<4x128xf32>
    %16 = arith.maximumf %2, %15 : vector<4x128xf32>
    %17 = math.rsqrt %16 : vector<4x128xf32>
    %18 = arith.mulf %14, %17 : vector<4x128xf32>
    %19 = vector.shape_cast %18 : vector<4x128xf32> to vector<4x1x128xf32>
    %20 = vector.broadcast %19 : vector<4x1x128xf32> to vector<4x8x128xf32>
    %21 = arith.mulf %0, %20 : vector<4x8x128xf32>
    %c0_6 = arith.constant 0 : index
    %c0_7 = arith.constant 0 : index
    %c0_8 = arith.constant 0 : index
    %22 = vector.load %arg2[%c0_6, %c0_7, %c0_8] : memref<4x8x128xf32, #tpu.memory_space<vmem>>, vector<4x8x128xf32>
    tpu.vector_store %arg2[%c0_6, %c0_7, %c0_8], %21 {strides = array<i32>} : memref<4x8x128xf32, #tpu.memory_space<vmem>>, vector<4x8x128xf32>,
    return
  }
  func.func @transform_0(%arg0: i32) -> (i32, i32, i32) {
    %c0_i32 = arith.constant 0 : i32
    %c0_i32_0 = arith.constant 0 : i32
    %c0_i32_1 = arith.constant 0 : i32
    return %c0_i32, %c0_i32_0, %arg0 : i32, i32, i32
  }
  func.func @transform_1(%arg0: i32) -> (i32, i32, i32) {
    %c0_i32 = arith.constant 0 : i32
    %c0_i32_0 = arith.constant 0 : i32
    %c0_i32_1 = arith.constant 0 : i32
    return %c0_i32, %c0_i32_0, %arg0 : i32, i32, i32
  }
}

</mosaic_0001>

<llo_original>
// kernel: tpu_custom_call.1
$region0: #{tpu_custom_call.1}
  #allocation0 [shape = 'u32[]', space=smem, size = 0x4, offset = 0x4, fixed_abs, tag = 'smem constant byte address 0x4 - core index']
  #allocation1 [shape = 'u32[144,128]{1,0:T(1,128)}', space=vmem, size = 0x12000, scoped, tag = 'internal scratch']
  %s0 = inlined_call_operand.hbm [shape: f32[4,8,128], index: 0, kind: input, shape index: {}]
  %s1 = inlined_call_operand.hbm [shape: f32[4,8,128], index: 1, kind: output, shape index: {}]
  %s2 = sld [smem:[#allocation0]]
  $region18: #{tpu_custom_call.1} parent=0
    _
  %s4 = ssub.s32 1, %s2
  %s5 = scalar_select 0, %s4, %s2
  $region1: #{tpu_custom_call.1} parent=0
    #allocation2 [shape = 'u8[16384]{0}', space=vmem, size = 0x4000, scoped, tag = 'input window, operand 0, single buffered']
    #allocation3 [shape = 's32[1]{0}', space=sflag, size = 0x4, scoped, tag = 'scoped memory for tpu_custom_call.1']
    #allocation4 [shape = 's32[1]{0}', space=sflag, size = 0x4, scoped, tag = 'scoped memory for tpu_custom_call.1']
    #allocation5 [shape = 'u8[16384]{0}', space=vmem, size = 0x4000, scoped, tag = 'output window, operand 0, single buffered']
    %6 = vsyncpa [#allocation3], 0
    %7 = vsyncpa [#allocation4], 0
    // Predicated region
    $region2: #{tpu_custom_call.1} parent=1 // pred_check
      _
    $region3: #{tpu_custom_call.1} parent=1 // pred_check_branch
      %9 = sbr.rel (0) target = $region5
    $region4: #{tpu_custom_call.1} parent=1 // pred_region
      %s11 = ssub.s32 512, 512
      %12 = vsyncadd [#allocation3], %s11
      %s13 = sshll.u32 [#allocation2], 4
      %s14 = int_to_ptr.vmem [resolvable:$true] %s13
      %19 = dma.hbm_to_vmem [thread:$0]  %s0, 512, %s14, [#allocation3], 128, 128, 8
    $region5: #{tpu_custom_call.1} parent=1 // pred_fallthru
      _
    // Predicated region
    $region6: #{tpu_custom_call.1} parent=1 // pred_check
      _
    $region7: #{tpu_custom_call.1} parent=1 // pred_check_branch
      %21 = sbr.rel (0) target = $region9
    $region8: #{tpu_custom_call.1} parent=1 // pred_region
      %22 = dma.done [#allocation3], 512
    $region9: #{tpu_custom_call.1} parent=1 // pred_fallthru
      _
    %v23 = vld [vmem:[#allocation2] sm:$0xff]
    %v24 = vld [vmem:[#allocation2 + $0x8] sm:$0xff]
    %v25 = vld [vmem:[#allocation2 + $0x10] sm:$0xff]
    %v26 = vld [vmem:[#allocation2 + $0x18] sm:$0xff]
    %v27 = vmul.f32 %v23, %v23
    %v28 = vmul.f32 %v24, %v24
    %v29 = vmul.f32 %v25, %v25
    %v30 = vmul.f32 %v26, %v26
    %v31 = vrot.slane %v27, 4
    %v32 = vadd.f32 %v27, %v31
    %v33 = vrot.slane %v32, 2
    %v34 = vadd.f32 %v32, %v33
    %v35 = vrot.slane %v34, 1
    %v36 = vadd.f32 %v34, %v35
    %v37 = vrot.slane %v28, 4
    %v38 = vadd.f32 %v28, %v37
    %v39 = vrot.slane %v38, 2
    %v40 = vadd.f32 %v38, %v39
    %v41 = vrot.slane %v40, 1
    %v42 = vadd.f32 %v40, %v41
    %v43 = vrot.slane %v29, 4
    %v44 = vadd.f32 %v29, %v43
    %v45 = vrot.slane %v44, 2
    %v46 = vadd.f32 %v44, %v45
    %v47 = vrot.slane %v46, 1
    %v48 = vadd.f32 %v46, %v47
    %v49 = vrot.slane %v30, 4
    %v50 = vadd.f32 %v30, %v49
    %v51 = vrot.slane %v50, 2
    %v52 = vadd.f32 %v50, %v51
    %v53 = vrot.slane %v52, 1
    %v54 = vadd.f32 %v52, %v53
    %v55 = vrsqrt.pop %v36
    %v56 = vmul.f32 %v36, %v55
    %vm57 = vcmp.eq.f32.partialorder %v36, inf
    %v58 = vsel %vm57, %v36, %v56
    %vm59 = vcmp.eq.f32.partialorder %v36, 0.0
    %v60 = vand.u32 %v36, 2147483648
    %v61 = vsel %vm59, %v60, %v58
    %v62 = vrsqrt.pop %v42
    %v63 = vmul.f32 %v42, %v62
    %vm64 = vcmp.eq.f32.partialorder %v42, inf
    %v65 = vsel %vm64, %v42, %v63
    %vm66 = vcmp.eq.f32.partialorder %v42, 0.0
    %v67 = vand.u32 %v42, 2147483648
    %v68 = vsel %vm66, %v67, %v65
    %v69 = vrsqrt.pop %v48
    %v70 = vmul.f32 %v48, %v69
    %vm71 = vcmp.eq.f32.partialorder %v48, inf
    %v72 = vsel %vm71, %v48, %v70
    %vm73 = vcmp.eq.f32.partialorder %v48, 0.0
    %v74 = vand.u32 %v48, 2147483648
    %v75 = vsel %vm73, %v74, %v72
    %v76 = vrsqrt.pop %v54
    %v77 = vmul.f32 %v54, %v76
    %vm78 = vcmp.eq.f32.partialorder %v54, inf
    %v79 = vsel %vm78, %v54, %v77
    %vm80 = vcmp.eq.f32.partialorder %v54, 0.0
    %v81 = vand.u32 %v54, 2147483648
    %v82 = vsel %vm80, %v81, %v79
    %v83 = vmax.f32 %v61, %v68
    %v84 = vmax.f32 %v75, %v82
    %v85 = vmax.f32 %v83, %v84
    %v86 = vsub.f32 %v61, %v85
    %v87 = vsub.f32 %v68, %v85
    %v88 = vsub.f32 %v75, %v85
    %v89 = vsub.f32 %v82, %v85
    %v90 = vmul.f32 %v86, 1.442695
    %v91 = vpow.pop %v90
    %v92 = vmul.f32 %v87, 1.442695
    %v93 = vpow.pop %v92
    %v94 = vmul.f32 %v88, 1.442695
    %v95 = vpow.pop %v94
    %v96 = vmul.f32 %v89, 1.442695
    %v97 = vpow.pop %v96
    %v102 = vrot.slane %v93, 7
    %vm103 = vcmask 1041409
    %v104 = vsel %vm103, %v102, %v91
    %v105 = vrot.slane %v95, 6
    %vm106 = vcmask 1042434
    %v107 = vsel %vm106, %v105, %v104
    %v108 = vrot.slane %v97, 5
    %vm109 = vcmask 1043459
    %v110 = vsel %vm109, %v108, %v107
    %vm112 = vcmask 1043456
    %v113 = vsel %vm112, %v110, 0.0
    %v114 = vrot.slane %v113, 4
    %v115 = vadd.f32 %v113, %v114
    %v116 = vrot.slane %v115, 2
    %v117 = vadd.f32 %v115, %v116
    %v118 = vrot.slane %v117, 1
    %v119 = vadd.f32 %v117, %v118
    %v120 = vlaneseq
    %v121 = vshrl.u32 %v120, 7
    %v122 = vsub.s32 0, %v121
    %v123 = vrot.slane %v119, %v122
    %v124 = vrcp.pop %v123
    %v125 = vmul.f32 %v91, %v124
    %v126 = vmul.f32 %v93, %v124
    %v127 = vmul.f32 %v95, %v124
    %v128 = vmul.f32 %v97, %v124
    %v129 = vmax.f32 %v36, 1e-12
    %v130 = vmax.f32 %v42, 1e-12
    %v131 = vmax.f32 %v48, 1e-12
    %v132 = vmax.f32 %v54, 1e-12
    %v133 = vrsqrt.pop %v129
    %v134 = vrsqrt.pop %v130
    %v135 = vrsqrt.pop %v131
    %v136 = vrsqrt.pop %v132
    %v137 = vmul.f32 %v125, %v133
    %v138 = vmul.f32 %v126, %v134
    %v139 = vmul.f32 %v127, %v135
    %v140 = vmul.f32 %v128, %v136
    %v141 = vlaneseq
    %v142 = vshrl.u32 %v141, 7
    %v143 = vsub.s32 0, %v142
    %v144 = vrot.slane %v137, %v143
    %v145 = vlaneseq
    %v146 = vshrl.u32 %v145, 7
    %v147 = vsub.s32 0, %v146
    %v148 = vrot.slane %v138, %v147
    %v149 = vlaneseq
    %v150 = vshrl.u32 %v149, 7
    %v151 = vsub.s32 0, %v150
    %v152 = vrot.slane %v139, %v151
    %v153 = vlaneseq
    %v154 = vshrl.u32 %v153, 7
    %v155 = vsub.s32 0, %v154
    %v156 = vrot.slane %v140, %v155
    %v157 = vmul.f32 %v23, %v144
    %v158 = vmul.f32 %v24, %v148
    %v159 = vmul.f32 %v25, %v152
    %v160 = vmul.f32 %v26, %v156
    %161 = vst [vmem:[#allocation5] sm:$0xff] %v157
    %162 = vst [vmem:[#allocation5 + $0x8] sm:$0xff] %v158
    %163 = vst [vmem:[#allocation5 + $0x10] sm:$0xff] %v159
    %164 = vst [vmem:[#allocation5 + $0x18] sm:$0xff] %v160
    // Predicated region
    $region10: #{tpu_custom_call.1} parent=1 // pred_check
      _
    $region11: #{tpu_custom_call.1} parent=1 // pred_check_branch
      %166 = sbr.rel (0) target = $region13
    $region12: #{tpu_custom_call.1} parent=1 // pred_region
      %s168 = ssub.s32 512, 512
      %169 = vsyncadd [#allocation4], %s168
      %s170 = sshll.u32 [#allocation5], 4
      %s171 = int_to_ptr.vmem [resolvable:$true] %s170
      %176 = dma.vmem_to_hbm [thread:$0]  %s171, 512, %s1, [#allocation4], 128, 128, 8
    $region13: #{tpu_custom_call.1} parent=1 // pred_fallthru
      _
    // Predicated region
    $region14: #{tpu_custom_call.1} parent=1 // pred_check
      _
    $region15: #{tpu_custom_call.1} parent=1 // pred_check_branch
      %178 = sbr.rel (0) target = $region17
    $region16: #{tpu_custom_call.1} parent=1 // pred_region
      %179 = dma.done [#allocation4], 512
    $region17: #{tpu_custom_call.1} parent=1 // pred_fallthru
      _
    %180 = vsyncpa [#allocation3], 1
    %181 = vsyncpa [#allocation4], 1

</llo_original>
